<compile_context>
chip_gen: v7x
topology: tpu7x:2x2x1
jax: 0.10.0
libtpu: 0.0.40
codegen_flags: <defaults>
</compile_context>

<pallas_src>
import functools

import jax
import jax.numpy as jnp
from jax import lax
from jax.experimental import pallas as pl
from jax.experimental.pallas import tpu as pltpu

# Fixed module dimensions (in_dim = y_obs.shape[1] + 2 = 30 + 2 = 32).
D_IN, H0, H1, D_OUT = 32, 50, 20, 2

# Packed-parameter layout (row offsets 16-aligned for bf16 sublane packing).
OFF0, OFF1, OFF2 = 0, 64, 96
PACK_ROWS, PACK_COLS = 112, 128


def mlp_kernel(x_ref, wp_ref, bp_ref, o_ref):
    xb = x_ref[...].astype(jnp.bfloat16)            # (TILE_B, D_IN) bf16, cast in-kernel
    wp = wp_ref[...]                                # (PACK_ROWS, PACK_COLS) bf16
    bp = bp_ref[...]                                # (PACK_ROWS, 1) f32

    # Static carves of the packed parameter slabs.
    w0 = wp[OFF0:OFF0 + H0, :D_IN]                  # (50, 32) bf16
    w1 = wp[OFF1:OFF1 + H1, :H0]                    # (20, 50) bf16
    w2 = wp[OFF2:OFF2 + D_OUT, :H1]                 # (2, 20)  bf16
    b0 = bp[OFF0:OFF0 + H0, :]                      # (50, 1)  f32
    b1 = bp[OFF1:OFF1 + H1, :]                      # (20, 1)  f32
    b2 = bp[OFF2:OFF2 + D_OUT, :]                   # (2, 1)   f32

    # dense0 + ReLU.  Contract the last dims of W0 (50,32) and the x block
    # (TILE_B,32) so the result is feature-major (50, TILE_B): the batch sits
    # on the 128-lane axis without any wrapper-side transpose.
    nt = (((1,), (1,)), ((), ()))
    h0 = lax.dot_general(w0, xb, nt, preferred_element_type=jnp.float32) + b0
    h0 = jnp.maximum(h0, 0.0)

    # TODO(synk): nn.Dropout is identity at inference; training-mode dropout
    # (pltpu.prng_random_bits mask + 1/(1-p) scale) is not emitted here.

    # dense1 + ReLU
    h1 = jnp.dot(w1, h0.astype(jnp.bfloat16),
                 preferred_element_type=jnp.float32) + b1
    h1 = jnp.maximum(h1, 0.0)

    # output + sigmoid
    logits = jnp.dot(w2, h1.astype(jnp.bfloat16),
                     preferred_element_type=jnp.float32) + b2
    o_ref[...] = jax.nn.sigmoid(logits)             # (D_OUT, TILE_B) f32


def _round_up(n, m):
    return ((n + m - 1) // m) * m


def init_params(key):
    """PyTorch-style uniform init; weights stored as (out_features, in_features)."""
    ks = jax.random.split(key, 6)

    def linear(kw, kb, fan_in, fan_out):
        bound = 1.0 / jnp.sqrt(jnp.float32(fan_in))
        w = jax.random.uniform(kw, (fan_out, fan_in), jnp.float32, -bound, bound)
        b = jax.random.uniform(kb, (fan_out,), jnp.float32, -bound, bound)
        return w, b

    return (linear(ks[0], ks[1], D_IN, H0),
            linear(ks[2], ks[3], H0, H1),
            linear(ks[4], ks[5], H1, D_OUT))


def pack_params(params):
    """Pack the 6 parameter tensors into one bf16 weight slab + one f32 bias slab."""
    (w0, b0), (w1, b1), (w2, b2) = params
    wp = jnp.zeros((PACK_ROWS, PACK_COLS), jnp.float32)
    wp = wp.at[OFF0:OFF0 + H0, :D_IN].set(w0)
    wp = wp.at[OFF1:OFF1 + H1, :H0].set(w1)
    wp = wp.at[OFF2:OFF2 + D_OUT, :H1].set(w2)
    bp = jnp.zeros((PACK_ROWS, 1), jnp.float32)
    bp = bp.at[OFF0:OFF0 + H0, 0].set(b0)
    bp = bp.at[OFF1:OFF1 + H1, 0].set(b1)
    bp = bp.at[OFF2:OFF2 + D_OUT, 0].set(b2)
    return wp.astype(jnp.bfloat16), bp


@functools.partial(jax.jit, static_argnames=("tile_b",))
def classifier_forward(x, wp, bp, *, tile_b=4096):
    """x: (B, 32) f32 (native PyTorch layout). Returns (B, 2) f32 probabilities."""
    b, f = x.shape
    assert f == D_IN

    if b <= 128:
        # One block equal to the full (unpadded) array: no padding, no boundary
        # blocks, grid of one.  (Tiny batches can't be split across TCs anyway.)
        tile = b
    else:
        # Large lane-dense tiles (multiple of 128), capped so the "parallel"
        # batch grid has >= 2 steps -> both v7x TensorCores get work.
        tile = max(128, min(_round_up(tile_b, 128),
                            _round_up(b, 128),
                            _round_up(-(-b // 2), 128)))
        # NOTE: for tile_b >> 32K, also set vmem_limit_bytes (v7x has 64 MiB VMEM).
    n_steps = pl.cdiv(b, tile)
    out_cols = n_steps * tile                        # output slab: all stores in-bounds

    flops = 2 * (D_IN * H0 + H0 * H1 + H1 * D_OUT) * out_cols
    bytes_accessed = (b * D_IN * 4 + out_cols * D_OUT * 4
                      + PACK_ROWS * PACK_COLS * 2 + PACK_ROWS * 4)

    out_t = pl.pallas_call(
        mlp_kernel,
        out_shape=jax.ShapeDtypeStruct((D_OUT, out_cols), jnp.float32),
        grid_spec=pltpu.PrefetchScalarGridSpec(
            num_scalar_prefetch=0,
            grid=(n_steps,),
            in_specs=[
                # Native (B, 32) f32 input; ragged tail handled by boundary blocks.
                pl.BlockSpec((tile, D_IN), lambda i: (i, 0)),
                # Packed params: constant index_map -> VMEM-resident across steps.
                pl.BlockSpec((PACK_ROWS, PACK_COLS), lambda i: (0, 0)),
                pl.BlockSpec((PACK_ROWS, 1), lambda i: (0, 0)),
            ],
            out_specs=pl.BlockSpec((D_OUT, tile), lambda i: (0, i)),
        ),
        compiler_params=pltpu.CompilerParams(
            dimension_semantics=("parallel",)),
        cost_estimate=pl.CostEstimate(
            flops=flops,
            transcendentals=D_OUT * out_cols,
            bytes_accessed=bytes_accessed),
    )(x, wp, bp)

    return out_t[:, :b].T                            # back to (B, 2) f32


def reference_forward(x, params):
    """Pure-JAX reference matching the kernel's bf16-operand / f32-accum math."""
    (w0, b0), (w1, b1), (w2, b2) = params

    def bf(a):
        return a.astype(jnp.bfloat16).astype(jnp.float32)

    h0 = jnp.maximum(bf(x) @ bf(w0).T + b0[None, :], 0.0)
    h1 = jnp.maximum(bf(h0) @ bf(w1).T + b1[None, :], 0.0)
    return jax.nn.sigmoid(bf(h1) @ bf(w2).T + b2[None, :])


if __name__ == "__main__":
    key = jax.random.PRNGKey(0)
    k_x, k_x2, k_p = jax.random.split(key, 3)

    params = init_params(k_p)
    wp, bp = pack_params(params)

    # Small, module-consistent shapes: batch=8, features = y_obs.shape[1]+2 = 32.
    x = jax.random.normal(k_x, (8, D_IN), jnp.float32)
    out = jax.block_until_ready(classifier_forward(x, wp, bp))
    ref = reference_forward(x, params)
    assert out.shape == (8, D_OUT)
    assert jnp.allclose(out, ref, atol=1e-4, rtol=1e-4)

    # Exercise the multi-step "parallel" grid + in-kernel ragged-tail path
    # (B=300 -> tile 256, grid of 2, last block hangs off and is sliced away).
    x2 = jax.random.normal(k_x2, (300, D_IN), jnp.float32)
    out2 = jax.block_until_ready(classifier_forward(x2, wp, bp))
    ref2 = reference_forward(x2, params)
    assert out2.shape == (300, D_OUT)
    assert jnp.allclose(out2, ref2, atol=1e-4, rtol=1e-4)

    print("KERNEL_OK")
</pallas_src>

<mosaic_0001>
module attributes {stable_mosaic.version = 11 : i64} {
  func.func @mlp_kernel(%arg0: i32, %arg1: memref<8x32xf32, #tpu.memory_space<vmem>>, %arg2: memref<112x128xbf16, #tpu.memory_space<vmem>>, %arg3: memref<112x1xf32, #tpu.memory_space<vmem>>, %arg4: memref<2x8xf32, #tpu.memory_space<vmem>>) attributes {dimension_semantics = [#tpu.dimension_semantics<parallel>], iteration_bounds = array<i64: 1>, scalar_prefetch = 0 : i64, scratch_operands = 0 : i64, tpu.core_type = #tpu.core_type<tc>, window_params = [{transform_indices = @transform_0, window_bounds = array<i64: 8, 32>}, {pipeline_mode = #tpu.pipeline_mode<synchronous>, transform_indices = @transform_1, window_bounds = array<i64: 112, 128>}, {pipeline_mode = #tpu.pipeline_mode<synchronous>, transform_indices = @transform_2, window_bounds = array<i64: 112, 1>}, {transform_indices = @transform_3, window_bounds = array<i64: 2, 8>}]} {
    %c0 = arith.constant 0 : index
    %c0_0 = arith.constant 0 : index
    %0 = vector.load %arg1[%c0, %c0_0] : memref<8x32xf32, #tpu.memory_space<vmem>>, vector<8x32xf32>
    %1 = arith.truncf %0 : vector<8x32xf32> to vector<8x32xbf16>
    %c0_1 = arith.constant 0 : index
    %c0_2 = arith.constant 0 : index
    %2 = vector.load %arg2[%c0_1, %c0_2] : memref<112x128xbf16, #tpu.memory_space<vmem>>, vector<112x128xbf16>
    %c0_3 = arith.constant 0 : index
    %c0_4 = arith.constant 0 : index
    %3 = vector.load %arg3[%c0_3, %c0_4] : memref<112x1xf32, #tpu.memory_space<vmem>>, vector<112x1xf32>
    %4 = vector.extract_strided_slice %2 {offsets = [0, 0], sizes = [50, 32], strides = [1, 1]} : vector<112x128xbf16> to vector<50x32xbf16>
    %5 = vector.extract_strided_slice %2 {offsets = [64, 0], sizes = [20, 50], strides = [1, 1]} : vector<112x128xbf16> to vector<20x50xbf16>
    %6 = vector.extract_strided_slice %2 {offsets = [96, 0], sizes = [2, 20], strides = [1, 1]} : vector<112x128xbf16> to vector<2x20xbf16>
    %7 = vector.extract_strided_slice %3 {offsets = [0, 0], sizes = [50, 1], strides = [1, 1]} : vector<112x1xf32> to vector<50x1xf32>
    %8 = vector.extract_strided_slice %3 {offsets = [64, 0], sizes = [20, 1], strides = [1, 1]} : vector<112x1xf32> to vector<20x1xf32>
    %9 = vector.extract_strided_slice %3 {offsets = [96, 0], sizes = [2, 1], strides = [1, 1]} : vector<112x1xf32> to vector<2x1xf32>
    %cst = arith.constant dense<0.000000e+00> : vector<50x8xf32>
    %10 = tpu.matmul %4, %1, %cst {dimension_numbers = #tpu.dot_dimension_numbers<[1], [1], [0], [0], [0, 0, 1, 0], [], []>} : vector<50x32xbf16>, vector<8x32xbf16>, vector<50x8xf32> -> vector<50x8xf32>
    %11 = vector.broadcast %7 : vector<50x1xf32> to vector<50x8xf32>
    %12 = arith.addf %10, %11 : vector<50x8xf32>
    %cst_5 = arith.constant 0.000000e+00 : f32
    %13 = vector.broadcast %cst_5 : f32 to vector<50x8xf32>
    %14 = arith.maximumf %12, %13 : vector<50x8xf32>
    %15 = arith.truncf %14 : vector<50x8xf32> to vector<50x8xbf16>
    %cst_6 = arith.constant dense<0.000000e+00> : vector<20x8xf32>
    %16 = tpu.matmul %5, %15, %cst_6 {dimension_numbers = #tpu.dot_dimension_numbers<[1], [0], [0], [1], [0, 0, 1, 1], [], []>} : vector<20x50xbf16>, vector<50x8xbf16>, vector<20x8xf32> -> vector<20x8xf32>
    %17 = vector.broadcast %8 : vector<20x1xf32> to vector<20x8xf32>
    %18 = arith.addf %16, %17 : vector<20x8xf32>
    %cst_7 = arith.constant 0.000000e+00 : f32
    %19 = vector.broadcast %cst_7 : f32 to vector<20x8xf32>
    %20 = arith.maximumf %18, %19 : vector<20x8xf32>
    %21 = arith.truncf %20 : vector<20x8xf32> to vector<20x8xbf16>
    %cst_8 = arith.constant dense<0.000000e+00> : vector<2x8xf32>
    %22 = tpu.matmul %6, %21, %cst_8 {dimension_numbers = #tpu.dot_dimension_numbers<[1], [0], [0], [1], [0, 0, 1, 1], [], []>} : vector<2x20xbf16>, vector<20x8xbf16>, vector<2x8xf32> -> vector<2x8xf32>
    %23 = vector.broadcast %9 : vector<2x1xf32> to vector<2x8xf32>
    %24 = arith.addf %22, %23 : vector<2x8xf32>
    %25 = arith.negf %24 : vector<2x8xf32>
    %26 = math.exp %25 : vector<2x8xf32>
    %cst_9 = arith.constant 1.000000e+00 : f32
    %27 = vector.broadcast %cst_9 : f32 to vector<2x8xf32>
    %28 = arith.addf %27, %26 : vector<2x8xf32>
    %29 = arith.divf %27, %28 : vector<2x8xf32>
    %c0_10 = arith.constant 0 : index
    %c0_11 = arith.constant 0 : index
    %30 = vector.load %arg4[%c0_10, %c0_11] : memref<2x8xf32, #tpu.memory_space<vmem>>, vector<2x8xf32>
    tpu.vector_store %arg4[%c0_10, %c0_11], %29 {strides = array<i32>} : memref<2x8xf32, #tpu.memory_space<vmem>>, vector<2x8xf32>,
    return
  }
  func.func @transform_0(%arg0: i32) -> (i32, i32) {
    %c0_i32 = arith.constant 0 : i32
    %c0_i32_0 = arith.constant 0 : i32
    return %arg0, %c0_i32 : i32, i32
  }
  func.func @transform_1(%arg0: i32) -> (i32, i32) {
    %c0_i32 = arith.constant 0 : i32
    %c0_i32_0 = arith.constant 0 : i32
    %c0_i32_1 = arith.constant 0 : i32
    return %c0_i32, %c0_i32_0 : i32, i32
  }
  func.func @transform_2(%arg0: i32) -> (i32, i32) {
    %c0_i32 = arith.constant 0 : i32
    %c0_i32_0 = arith.constant 0 : i32
    %c0_i32_1 = arith.constant 0 : i32
    return %c0_i32, %c0_i32_0 : i32, i32
  }
  func.func @transform_3(%arg0: i32) -> (i32, i32) {
    %c0_i32 = arith.constant 0 : i32
    %c0_i32_0 = arith.constant 0 : i32
    return %c0_i32, %arg0 : i32, i32
  }
}

</mosaic_0001>

<llo_original>
// kernel: classifier_forward.1
$region0: #{classifier_forward.1}
  #allocation0 [shape = 'u32[]', space=smem, size = 0x4, offset = 0x4, fixed_abs, tag = 'smem constant byte address 0x4 - core index']
  #allocation1 [shape = 'u32[144,128]{1,0:T(1,128)}', space=vmem, size = 0x12000, scoped, tag = 'internal scratch']
  %s0 = inlined_call_operand.vmem [shape: f32[8,32], index: 0, kind: input, shape index: {}]
  %s1 = inlined_call_operand.vmem [shape: bf16[112,128], index: 1, kind: input, shape index: {}]
  %s2 = inlined_call_operand.vmem [shape: f32[112,1], index: 2, kind: input, shape index: {}]
  %s3 = inlined_call_operand.hbm [shape: f32[2,8], index: 3, kind: output, shape index: {}]
  %s4 = sld [smem:[#allocation0]]
  $region22: #{classifier_forward.1} parent=0
    _
  %s6 = ssub.s32 1, %s4
  %s7 = scalar_select 0, %s6, %s4
  $region1: #{classifier_forward.1} parent=0
    #allocation2 [shape = 'u8[1024]{0}', space=vmem, size = 0x400, scoped, tag = 'output window, operand 0, single buffered']
    #allocation3 [shape = 's32[1]{0}', space=sflag, size = 0x4, scoped, tag = 'scoped memory for classifier_forward.1']
    %8 = vsyncpa [#allocation3], 0
    // Predicated region
    $region2: #{classifier_forward.1} parent=1 // pred_check
      _
    $region3: #{classifier_forward.1} parent=1 // pred_check_branch
      %10 = sbr.rel (0) target = $region5
    $region4: #{classifier_forward.1} parent=1 // pred_region
      _
    $region5: #{classifier_forward.1} parent=1 // pred_fallthru
      _
    // Predicated region
    $region6: #{classifier_forward.1} parent=1 // pred_check
      _
    $region7: #{classifier_forward.1} parent=1 // pred_check_branch
      %12 = sbr.rel (0) target = $region9
    $region8: #{classifier_forward.1} parent=1 // pred_region
      _
    $region9: #{classifier_forward.1} parent=1 // pred_fallthru
      _
    // Predicated region
    $region10: #{classifier_forward.1} parent=1 // pred_check
      _
    $region11: #{classifier_forward.1} parent=1 // pred_check_branch
      %14 = sbr.rel (0) target = $region13
    $region12: #{classifier_forward.1} parent=1 // pred_region
      _
    $region13: #{classifier_forward.1} parent=1 // pred_fallthru
      _
    %v16 = vld [vmem:[%s0] sm:$0xff]
    %v17 = vpack.c.bf16 %v16, %v16
    %v18 = vld [vmem:[%s1] sm:$0xf]
    %v19 = vld [vmem:[%s1 + $0x4] sm:$0xf]
    %v20 = vld [vmem:[%s1 + $0x8] sm:$0xf]
    %v21 = vld [vmem:[%s1 + $0xc] sm:$0xf]
    %v22 = vld [vmem:[%s1 + $0x10] sm:$0xf]
    %v23 = vld [vmem:[%s1 + $0x14] sm:$0xf]
    %v24 = vld [vmem:[%s1 + $0x18] sm:$0xf]
    %v25 = vld [vmem:[%s1 + $0x20] sm:$0xf]
    %v26 = vld [vmem:[%s1 + $0x24] sm:$0xf]
    %v27 = vld [vmem:[%s1 + $0x28] sm:$0xf]
    %v28 = vld [vmem:[%s1 + $0x30] sm:$0xf]
    %v29 = vld [vmem:[%s2] sm:$0xff]
    %v30 = vld [vmem:[%s2 + $0x8] sm:$0xff]
    %v31 = vld [vmem:[%s2 + $0x10] sm:$0xff]
    %v32 = vld [vmem:[%s2 + $0x18] sm:$0xff]
    %v33 = vld [vmem:[%s2 + $0x20] sm:$0xff]
    %v34 = vld [vmem:[%s2 + $0x28] sm:$0xff]
    %v35 = vld [vmem:[%s2 + $0x30] sm:$0xff]
    %v36 = vld [vmem:[%s2 + $0x40] sm:$0xff]
    %v37 = vld [vmem:[%s2 + $0x48] sm:$0xff]
    %v38 = vld [vmem:[%s2 + $0x50] sm:$0xff]
    %v39 = vld [vmem:[%s2 + $0x60] sm:$0xff]
    %41 = vset.pattern.permute.xlu0 0
    %42 = vperm.xlu0 %41, %v29
    %v43 = vpop.permute.xlu0 %42
    %46 = vset.pattern.permute.xlu0 0
    %47 = vperm.xlu0 %46, %v30
    %v48 = vpop.permute.xlu0 %47
    %51 = vset.pattern.permute.xlu0 0
    %52 = vperm.xlu0 %51, %v31
    %v53 = vpop.permute.xlu0 %52
    %56 = vset.pattern.permute.xlu0 0
    %57 = vperm.xlu0 %56, %v32
    %v58 = vpop.permute.xlu0 %57
    %61 = vset.pattern.permute.xlu0 0
    %62 = vperm.xlu0 %61, %v33
    %v63 = vpop.permute.xlu0 %62
    %66 = vset.pattern.permute.xlu0 0
    %67 = vperm.xlu0 %66, %v34
    %v68 = vpop.permute.xlu0 %67
    %71 = vset.pattern.permute.xlu0 0
    %72 = vperm.xlu0 %71, %v35
    %v73 = vpop.permute.xlu0 %72
    %v82 = vunpack.c.l.b16 %v18
    %v83 = vunpack.c.l.b16 %v19
    %v84 = vunpack.c.l.b16 %v20
    %v85 = vunpack.c.l.b16 %v21
    %v86 = vunpack.c.l.b16 %v22
    %v87 = vunpack.c.l.b16 %v23
    %v88 = vunpack.c.l.b16 %v24
    %v89 = vpack.c.b16 %v83, %v82
    %v90 = vpack.c.b16 %v85, %v84
    %v91 = vpack.c.b16 %v87, %v86
    %v92 = vpack.c.b16 %v88, %v88
    %vm93 = vcmask 261120
    %v95 = vsel %vm93, %v89, 0
    %v98 = vsel %vm93, %v90, 0
    %v101 = vsel %vm93, %v91, 0
    %v104 = vsel %vm93, %v92, 0
    %v107 = vsel %vm93, %v17, 0
    %109 = vmatprep.subr.bf16.mxu0 0
    %110 = vmatpush1.bf16.xpose.msra.mxu0 %v107
    %111 = vmatprep.subr.bf16.mxu0 0
    %112 = vmatpush1.bf16.xpose.msra.mxu0 0
    %113 = vmatprep.subr.bf16.mxu0 0
    %114 = vmatpush1.bf16.xpose.msra.mxu0 0
    %115 = vmatprep.subr.bf16.mxu0 0
    %116 = vmatpush1.bf16.xpose.msra.mxu0 0
    %117 = vmatprep.subr.bf16.mxu0 0
    %118 = vmatpush1.bf16.xpose.msra.mxu0 0
    %119 = vmatprep.subr.bf16.mxu0 0
    %120 = vmatpush1.bf16.xpose.msra.mxu0 0
    %121 = vmatprep.subr.bf16.mxu0 0
    %122 = vmatpush1.bf16.xpose.msra.mxu0 0
    %123 = vmatprep.subr.bf16.mxu0 0
    %124 = vmatpush1.bf16.xpose.msra.mxu0 0
    %125 = vmatprep.subr.bf16.mxu0 0
    %126 = vmatpush1.bf16.xpose.msra.mxu0 0
    %127 = vmatprep.subr.bf16.mxu0 0
    %128 = vmatpush1.bf16.xpose.msra.mxu0 0
    %129 = vmatprep.subr.bf16.mxu0 0
    %130 = vmatpush1.bf16.xpose.msra.mxu0 0
    %131 = vmatprep.subr.bf16.mxu0 0
    %132 = vmatpush1.bf16.xpose.msra.mxu0 0
    %133 = vmatprep.subr.bf16.mxu0 0
    %134 = vmatpush1.bf16.xpose.msra.mxu0 0
    %135 = vmatprep.subr.bf16.mxu0 0
    %136 = vmatpush1.bf16.xpose.msra.mxu0 0
    %137 = vmatprep.subr.bf16.mxu0 0
    %138 = vmatpush1.bf16.xpose.msra.mxu0 0
    %139 = vmatprep.subr.bf16.mxu0 0
    %140 = vmatpush1.bf16.xpose.msra.mxu0 0
    %141 = vmatprep.mubr.bf16.mxu0 0
    %142 = vmatmul.mubr.bf16.gmra.mrb[0].mxu0 %v95
    %v143 = vpop.f32.mrb[0].mxu0
    %v144 = vadd.f32 %v43, %v143
    %v145 = vpop.f32.mrb[0].mxu0
    %v146 = vpop.f32.mrb[0].mxu0
    %v147 = vadd.f32 %v48, %v146
    %v148 = vpop.f32.mrb[0].mxu0
    %149 = vmatprep.mubr.bf16.mxu0 0
    %150 = vmatmul.mubr.bf16.gmra.mrb[0].mxu0 %v98
    %v151 = vpop.f32.mrb[0].mxu0
    %v152 = vadd.f32 %v53, %v151
    %v153 = vpop.f32.mrb[0].mxu0
    %v154 = vpop.f32.mrb[0].mxu0
    %v155 = vadd.f32 %v58, %v154
    %v156 = vpop.f32.mrb[0].mxu0
    %157 = vmatprep.mubr.bf16.mxu0 0
    %158 = vmatmul.mubr.bf16.gmra.mrb[0].mxu0 %v101
    %v159 = vpop.f32.mrb[0].mxu0
    %v160 = vadd.f32 %v63, %v159
    %v161 = vpop.f32.mrb[0].mxu0
    %v162 = vpop.f32.mrb[0].mxu0
    %v163 = vadd.f32 %v68, %v162
    %v164 = vpop.f32.mrb[0].mxu0
    %165 = vmatprep.mubr.bf16.mxu0 0
    %166 = vmatmul.mubr.bf16.gmra.mrb[0].mxu0 %v104
    %v167 = vpop.f32.mrb[0].mxu0
    %v168 = vadd.f32 %v73, %v167
    %v169 = vpop.f32.mrb[0].mxu0
    %v170 = vpop.f32.mrb[0].mxu0
    %v171 = vpop.f32.mrb[0].mxu0
    %172 = vdwg.mxu0
    %v173 = vmax.f32 %v144, 0.0
    %v174 = vmax.f32 %v147, 0.0
    %v175 = vmax.f32 %v152, 0.0
    %v176 = vmax.f32 %v155, 0.0
    %v177 = vmax.f32 %v160, 0.0
    %v178 = vmax.f32 %v163, 0.0
    %v179 = vmax.f32 %v168, 0.0
    %v180 = vpack.c.bf16 %v174, %v173
    %v181 = vpack.c.bf16 %v176, %v175
    %v182 = vpack.c.bf16 %v178, %v177
    %v183 = vpack.c.bf16 %v179, %v179
    %185 = vset.pattern.permute.xlu0 0
    %186 = vperm.xlu0 %185, %v36
    %v187 = vpop.permute.xlu0 %186
    %190 = vset.pattern.permute.xlu0 0
    %191 = vperm.xlu0 %190, %v37
    %v192 = vpop.permute.xlu0 %191
    %195 = vset.pattern.permute.xlu0 0
    %196 = vperm.xlu0 %195, %v38
    %v197 = vpop.permute.xlu0 %196
    %v202 = vunpack.c.l.b16 %v25
    %v203 = vunpack.c.l.b16 %v26
    %v204 = vunpack.c.l.b16 %v27
    %v205 = vpack.c.b16 %v203, %v202
    %v206 = vpack.c.b16 %v204, %v204
    %vm207 = vcmask 408576
    %v209 = vsel %vm207, %v205, 0
    %v212 = vsel %vm207, %v206, 0
    %vm214 = vcmask 1040384
    %v216 = vsel %vm214, %v183, 0
    %218 = vmatprep.subr.bf16.mxu0 0
    %219 = vmatpush1.bf16.msra.mxu0 %v180
    %220 = vmatprep.subr.bf16.mxu0 0
    %221 = vmatpush1.bf16.msra.mxu0 %v181
    %222 = vmatprep.subr.bf16.mxu0 0
    %223 = vmatpush1.bf16.msra.mxu0 %v182
    %224 = vmatprep.subr.bf16.mxu0 0
    %225 = vmatpush1.bf16.msra.mxu0 %v216
    %226 = vmatprep.subr.bf16.mxu0 0
    %227 = vmatpush1.bf16.msra.mxu0 0
    %228 = vmatprep.subr.bf16.mxu0 0
    %229 = vmatpush1.bf16.msra.mxu0 0
    %230 = vmatprep.subr.bf16.mxu0 0
    %231 = vmatpush1.bf16.msra.mxu0 0
    %232 = vmatprep.subr.bf16.mxu0 0
    %233 = vmatpush1.bf16.msra.mxu0 0
    %234 = vmatprep.subr.bf16.mxu0 0
    %235 = vmatpush1.bf16.msra.mxu0 0
    %236 = vmatprep.subr.bf16.mxu0 0
    %237 = vmatpush1.bf16.msra.mxu0 0
    %238 = vmatprep.subr.bf16.mxu0 0
    %239 = vmatpush1.bf16.msra.mxu0 0
    %240 = vmatprep.subr.bf16.mxu0 0
    %241 = vmatpush1.bf16.msra.mxu0 0
    %242 = vmatprep.subr.bf16.mxu0 0
    %243 = vmatpush1.bf16.msra.mxu0 0
    %244 = vmatprep.subr.bf16.mxu0 0
    %245 = vmatpush1.bf16.msra.mxu0 0
    %246 = vmatprep.subr.bf16.mxu0 0
    %247 = vmatpush1.bf16.msra.mxu0 0
    %248 = vmatprep.subr.bf16.mxu0 0
    %249 = vmatpush1.bf16.msra.mxu0 0
    %250 = vmatprep.mubr.bf16.mxu0 0
    %251 = vmatmul.mubr.bf16.gmra.mrb[0].mxu0 %v209
    %v252 = vpop.f32.mrb[0].mxu0
    %v253 = vadd.f32 %v187, %v252
    %v254 = vpop.f32.mrb[0].mxu0
    %v255 = vpop.f32.mrb[0].mxu0
    %v256 = vadd.f32 %v192, %v255
    %v257 = vpop.f32.mrb[0].mxu0
    %258 = vmatprep.mubr.bf16.mxu0 0
    %259 = vmatmul.mubr.bf16.gmra.mrb[0].mxu0 %v212
    %v260 = vpop.f32.mrb[0].mxu0
    %v261 = vadd.f32 %v197, %v260
    %v262 = vpop.f32.mrb[0].mxu0
    %v263 = vpop.f32.mrb[0].mxu0
    %v264 = vpop.f32.mrb[0].mxu0
    %265 = vdwg.mxu0
    %v266 = vmax.f32 %v253, 0.0
    %v267 = vmax.f32 %v256, 0.0
    %v268 = vmax.f32 %v261, 0.0
    %v269 = vpack.c.bf16 %v267, %v266
    %v270 = vpack.c.bf16 %v268, %v268
    %272 = vset.pattern.permute.xlu0 0
    %273 = vperm.xlu0 %272, %v39
    %v274 = vpop.permute.xlu0 %273
    %vm276 = vcmask 162816
    %v278 = vsel %vm276, %v28, 0
    %vm280 = vcmask 1041408
    %v282 = vsel %vm280, %v270, 0
    %284 = vmatprep.subr.bf16.mxu0 0
    %285 = vmatpush1.bf16.msra.mxu0 %v269
    %286 = vmatprep.subr.bf16.mxu0 0
    %287 = vmatpush1.bf16.msra.mxu0 %v282
    %288 = vmatprep.subr.bf16.mxu0 0
    %289 = vmatpush1.bf16.msra.mxu0 0
    %290 = vmatprep.subr.bf16.mxu0 0
    %291 = vmatpush1.bf16.msra.mxu0 0
    %292 = vmatprep.subr.bf16.mxu0 0
    %293 = vmatpush1.bf16.msra.mxu0 0
    %294 = vmatprep.subr.bf16.mxu0 0
    %295 = vmatpush1.bf16.msra.mxu0 0
    %296 = vmatprep.subr.bf16.mxu0 0
    %297 = vmatpush1.bf16.msra.mxu0 0
    %298 = vmatprep.subr.bf16.mxu0 0
    %299 = vmatpush1.bf16.msra.mxu0 0
    %300 = vmatprep.subr.bf16.mxu0 0
    %301 = vmatpush1.bf16.msra.mxu0 0
    %302 = vmatprep.subr.bf16.mxu0 0
    %303 = vmatpush1.bf16.msra.mxu0 0
    %304 = vmatprep.subr.bf16.mxu0 0
    %305 = vmatpush1.bf16.msra.mxu0 0
    %306 = vmatprep.subr.bf16.mxu0 0
    %307 = vmatpush1.bf16.msra.mxu0 0
    %308 = vmatprep.subr.bf16.mxu0 0
    %309 = vmatpush1.bf16.msra.mxu0 0
    %310 = vmatprep.subr.bf16.mxu0 0
    %311 = vmatpush1.bf16.msra.mxu0 0
    %312 = vmatprep.subr.bf16.mxu0 0
    %313 = vmatpush1.bf16.msra.mxu0 0
    %314 = vmatprep.subr.bf16.mxu0 0
    %315 = vmatpush1.bf16.msra.mxu0 0
    %316 = vmatprep.mubr.bf16.mxu0 0
    %317 = vmatmul.mubr.bf16.gmra.mrb[0].mxu0 %v278
    %v318 = vpop.f32.mrb[0].mxu0
    %v319 = vadd.f32 %v274, %v318
    %v320 = vpop.f32.mrb[0].mxu0
    %v321 = vpop.f32.mrb[0].mxu0
    %v322 = vpop.f32.mrb[0].mxu0
    %323 = vdwg.mxu0
    %v324 = vxor.u32 %v319, 2147483648
    %v325 = vmul.f32 %v324, 1.442695
    %v326 = vpow.pop %v325
    %v327 = vadd.f32 %v326, 1.0
    %v328 = vrcp.pop %v327
    %v329 = vmul.f32 1.0, %v328
    %vm330 = vcmask 58368
    %331 = vst.msk [vmem:[#allocation2] sm:$0x3] %vm330, %v329
    // Predicated region
    $region14: #{classifier_forward.1} parent=1 // pred_check
      _
    $region15: #{classifier_forward.1} parent=1 // pred_check_branch
      %333 = sbr.rel (0) target = $region17
    $region16: #{classifier_forward.1} parent=1 // pred_region
      %s335 = ssub.s32 32, 32
      %336 = vsyncadd [#allocation3], %s335
      %s338 = sshll.u32 [#allocation2], 4
      %s339 = int_to_ptr.vmem [resolvable:$true] %s338
      %341 = dma.vmem_to_hbm [thread:$0]  %s339, 32, %s3, [#allocation3]
    $region17: #{classifier_forward.1} parent=1 // pred_fallthru
      _
    // Predicated region
    $region18: #{classifier_forward.1} parent=1 // pred_check
      _
    $region19: #{classifier_forward.1} parent=1 // pred_check_branch
      %343 = sbr.rel (0) target = $region21
    $region20: #{classifier_forward.1} parent=1 // pred_region
      %344 = dma.done [#allocation3], 32
    $region21: #{classifier_forward.1} parent=1 // pred_fallthru
      _
    %345 = vsyncpa [#allocation3], 1

</llo_original>
